<compile_context>
chip_gen: v6e
topology: v6e:2x2x1
jax: 0.10.0
libtpu: 0.0.40
codegen_flags: <defaults>
</compile_context>

<pallas_src>
import functools
import math

import jax
import jax.numpy as jnp
import numpy as np
from jax.experimental import pallas as pl
from jax.experimental.pallas import tpu as pltpu


# ----------------------------- kernel bodies ------------------------------ #

def _attn_core(q, k, v, scale, mask=None):
    """q, k, v: (Th, S, d) f32; mask: (Th, Sq, Sk) int32 or None."""
    s = jnp.einsum("hqd,hkd->hqk", q, k,
                   preferred_element_type=jnp.float32) * scale
    if mask is not None:
        s = jnp.where(mask == 0, jnp.float32(-1e9), s)
    m = jnp.max(s, axis=-1, keepdims=True)          # stable softmax
    p = jnp.exp(s - m)
    w = p / jnp.sum(p, axis=-1, keepdims=True)
    o = jnp.einsum("hqk,hkd->hqd", w, v,
                   preferred_element_type=jnp.float32)
    return o, w


def _sdpa_kernel(q_ref, k_ref, v_ref, o_ref, w_ref, *, scale):
    q = q_ref[...].astype(jnp.float32)
    k = k_ref[...].astype(jnp.float32)
    v = v_ref[...].astype(jnp.float32)
    o, w = _attn_core(q, k, v, scale)
    o_ref[...] = o.astype(o_ref.dtype)
    w_ref[...] = w.astype(w_ref.dtype)


def _sdpa_kernel_masked(q_ref, k_ref, v_ref, m_ref, o_ref, w_ref, *, scale):
    q = q_ref[...].astype(jnp.float32)
    k = k_ref[...].astype(jnp.float32)
    v = v_ref[...].astype(jnp.float32)
    o, w = _attn_core(q, k, v, scale, mask=m_ref[...])
    o_ref[...] = o.astype(o_ref.dtype)
    w_ref[...] = w.astype(w_ref.dtype)


# ------------------------------ host wrapper ------------------------------ #

def _pick_head_tile(bh, sq, sk, d, target_bytes=4 << 20):
    """Largest divisor of bh keeping a block's f32 footprint ~target_bytes,
    preferring >= 2 grid steps so v7x megacore can split the work."""
    per_head = 4 * (2 * sq * d + 2 * sk * d + 2 * sq * sk)  # q,k,v,o,s,w (f32)
    t = max(1, min(bh, target_bytes // max(per_head, 1)))
    while bh % t != 0:
        t -= 1
    if t == bh and bh > 1:
        t = bh // 2
        while bh % t != 0:
            t -= 1
    return t


def scaled_dot_product_attention(Q, K, V, mask=None, d_model=None):
    """Q: (..., Sq, d), K/V: (..., Sk, d), mask broadcastable to (..., Sq, Sk).

    Returns (output (..., Sq, d), attention_weights (..., Sq, Sk)).
    """
    # TODO(synk): nn.Dropout(p=0.1) on the attention weights is a train-mode
    # stochastic op; this kernel implements eval-mode (identity) semantics.
    *lead, sq, d = Q.shape
    sk = K.shape[-2]
    if d_model is None:
        d_model = d
    scale = 1.0 / math.sqrt(d_model)

    bh = int(np.prod(lead)) if lead else 1
    q3 = Q.reshape(bh, sq, d)
    k3 = K.reshape(bh, sk, d)
    v3 = V.reshape(bh, sk, d)

    t = _pick_head_tile(bh, sq, sk, d)
    grid = (bh // t,)

    qkv_specs = [
        pl.BlockSpec((t, sq, d), lambda i: (i, 0, 0)),
        pl.BlockSpec((t, sk, d), lambda i: (i, 0, 0)),
        pl.BlockSpec((t, sk, d), lambda i: (i, 0, 0)),
    ]
    out_specs = [
        pl.BlockSpec((t, sq, d), lambda i: (i, 0, 0)),
        pl.BlockSpec((t, sq, sk), lambda i: (i, 0, 0)),
    ]
    out_shape = [
        jax.ShapeDtypeStruct((bh, sq, d), Q.dtype),
        jax.ShapeDtypeStruct((bh, sq, sk), Q.dtype),
    ]
    cparams = pltpu.CompilerParams(dimension_semantics=("parallel",))

    if mask is None:
        out, w = pl.pallas_call(
            functools.partial(_sdpa_kernel, scale=scale),
            out_shape=out_shape,
            grid=grid,
            in_specs=qkv_specs,
            out_specs=out_specs,
            compiler_params=cparams,
        )(q3, k3, v3)
    else:
        m3 = jnp.broadcast_to(mask, tuple(lead) + (sq, sk)).astype(jnp.int32)
        m3 = m3.reshape(bh, sq, sk)
        out, w = pl.pallas_call(
            functools.partial(_sdpa_kernel_masked, scale=scale),
            out_shape=out_shape,
            grid=grid,
            in_specs=qkv_specs
            + [pl.BlockSpec((t, sq, sk), lambda i: (i, 0, 0))],
            out_specs=out_specs,
            compiler_params=cparams,
        )(q3, k3, v3, m3)

    return out.reshape(*lead, sq, d), w.reshape(*lead, sq, sk)


# ------------------------------- reference -------------------------------- #

def _sdpa_ref(Q, K, V, mask=None, d_model=None):
    d = Q.shape[-1] if d_model is None else d_model
    qf, kf, vf = (a.astype(jnp.float32) for a in (Q, K, V))
    s = jnp.einsum("...qd,...kd->...qk", qf, kf) / math.sqrt(d)
    if mask is not None:
        s = jnp.where(mask == 0, jnp.float32(-1e9), s)
    w = jax.nn.softmax(s, axis=-1)
    o = jnp.einsum("...qk,...kd->...qd", w, vf)
    return o.astype(Q.dtype), w.astype(Q.dtype)


if __name__ == "__main__":
    key = jax.random.PRNGKey(0)
    kq, kk, kv = jax.random.split(key, 3)
    B, H, S, D = 2, 4, 8, 32

    Q = jax.random.normal(kq, (B, H, S, D), dtype=jnp.float32)
    K = jax.random.normal(kk, (B, H, S, D), dtype=jnp.float32)
    V = jax.random.normal(kv, (B, H, S, D), dtype=jnp.float32)

    # no-mask path (module default)
    out, w = scaled_dot_product_attention(Q, K, V)
    jax.block_until_ready((out, w))
    out_ref, w_ref = _sdpa_ref(Q, K, V)
    assert out.shape == (B, H, S, D) and w.shape == (B, H, S, S)
    assert out.dtype == Q.dtype and w.dtype == Q.dtype
    assert jnp.allclose(out, out_ref, atol=2e-5, rtol=2e-5)
    assert jnp.allclose(w, w_ref, atol=2e-5, rtol=2e-5)

    # masked path (causal mask broadcast over batch/heads)
    mask = jnp.tril(jnp.ones((S, S), dtype=jnp.int32))[None, None]
    out_m, w_m = scaled_dot_product_attention(Q, K, V, mask=mask)
    jax.block_until_ready((out_m, w_m))
    out_mr, w_mr = _sdpa_ref(Q, K, V, mask=mask)
    assert jnp.allclose(out_m, out_mr, atol=2e-5, rtol=2e-5)
    assert jnp.allclose(w_m, w_mr, atol=2e-5, rtol=2e-5)

    print("KERNEL_OK")
</pallas_src>

<mosaic_0001>
module attributes {stable_mosaic.version = 11 : i64} {
  func.func @_sdpa_kernel(%arg0: i32, %arg1: memref<4x8x32xf32, #tpu.memory_space<vmem>>, %arg2: memref<4x8x32xf32, #tpu.memory_space<vmem>>, %arg3: memref<4x8x32xf32, #tpu.memory_space<vmem>>, %arg4: memref<4x8x32xf32, #tpu.memory_space<vmem>>, %arg5: memref<4x8x8xf32, #tpu.memory_space<vmem>>) attributes {dimension_semantics = [#tpu.dimension_semantics<parallel>], iteration_bounds = array<i64: 2>, scalar_prefetch = 0 : i64, scratch_operands = 0 : i64, tpu.core_type = #tpu.core_type<tc>, window_params = [{transform_indices = @transform_0, window_bounds = array<i64: 4, 8, 32>}, {transform_indices = @transform_1, window_bounds = array<i64: 4, 8, 32>}, {transform_indices = @transform_2, window_bounds = array<i64: 4, 8, 32>}, {transform_indices = @transform_3, window_bounds = array<i64: 4, 8, 32>}, {transform_indices = @transform_4, window_bounds = array<i64: 4, 8, 8>}]} {
    %c0 = arith.constant 0 : index
    %c0_0 = arith.constant 0 : index
    %c0_1 = arith.constant 0 : index
    %0 = vector.load %arg1[%c0, %c0_0, %c0_1] : memref<4x8x32xf32, #tpu.memory_space<vmem>>, vector<4x8x32xf32>
    %c0_2 = arith.constant 0 : index
    %c0_3 = arith.constant 0 : index
    %c0_4 = arith.constant 0 : index
    %1 = vector.load %arg2[%c0_2, %c0_3, %c0_4] : memref<4x8x32xf32, #tpu.memory_space<vmem>>, vector<4x8x32xf32>
    %c0_5 = arith.constant 0 : index
    %c0_6 = arith.constant 0 : index
    %c0_7 = arith.constant 0 : index
    %2 = vector.load %arg3[%c0_5, %c0_6, %c0_7] : memref<4x8x32xf32, #tpu.memory_space<vmem>>, vector<4x8x32xf32>
    "tpu.trace_start"() <{level = 10 : i32, message = "hqd,hkd->hqk"}> : () -> ()
    %cst = arith.constant dense<0.000000e+00> : vector<4x8x8xf32>
    %3 = tpu.matmul %0, %1, %cst {dimension_numbers = #tpu.dot_dimension_numbers<[2], [2], [1], [1], [0, 0, 0, 1, 1, 1], [0], [0]>} : vector<4x8x32xf32>, vector<4x8x32xf32>, vector<4x8x8xf32> -> vector<4x8x8xf32>
    "tpu.trace_stop"() : () -> ()
    %cst_8 = arith.constant 0.176776692 : f32
    %4 = vector.broadcast %cst_8 : f32 to vector<4x8x8xf32>
    %5 = arith.mulf %3, %4 : vector<4x8x8xf32>
    %cst_9 = arith.constant dense<0xFF800000> : vector<4x8xf32>
    %6 = vector.multi_reduction <maximumf>, %5, %cst_9 [2] : vector<4x8x8xf32> to vector<4x8xf32>
    %7 = vector.shape_cast %6 : vector<4x8xf32> to vector<4x8x1xf32>
    %8 = vector.broadcast %7 : vector<4x8x1xf32> to vector<4x8x8xf32>
    %9 = arith.subf %5, %8 : vector<4x8x8xf32>
    %10 = math.exp %9 : vector<4x8x8xf32>
    %cst_10 = arith.constant dense<0.000000e+00> : vector<4x8xf32>
    %11 = vector.multi_reduction <add>, %10, %cst_10 [2] : vector<4x8x8xf32> to vector<4x8xf32>
    %12 = vector.shape_cast %11 : vector<4x8xf32> to vector<4x8x1xf32>
    %13 = vector.broadcast %12 : vector<4x8x1xf32> to vector<4x8x8xf32>
    %14 = arith.divf %10, %13 : vector<4x8x8xf32>
    "tpu.trace_start"() <{level = 10 : i32, message = "hqk,hkd->hqd"}> : () -> ()
    %cst_11 = arith.constant dense<0.000000e+00> : vector<4x8x32xf32>
    %15 = tpu.matmul %14, %2, %cst_11 {dimension_numbers = #tpu.dot_dimension_numbers<[2], [1], [1], [2], [0, 0, 0, 1, 1, 2], [0], [0]>} : vector<4x8x8xf32>, vector<4x8x32xf32>, vector<4x8x32xf32> -> vector<4x8x32xf32>
    "tpu.trace_stop"() : () -> ()
    %c0_12 = arith.constant 0 : index
    %c0_13 = arith.constant 0 : index
    %c0_14 = arith.constant 0 : index
    %16 = vector.load %arg4[%c0_12, %c0_13, %c0_14] : memref<4x8x32xf32, #tpu.memory_space<vmem>>, vector<4x8x32xf32>
    tpu.vector_store %arg4[%c0_12, %c0_13, %c0_14], %15 {strides = array<i32>} : memref<4x8x32xf32, #tpu.memory_space<vmem>>, vector<4x8x32xf32>,
    %c0_15 = arith.constant 0 : index
    %c0_16 = arith.constant 0 : index
    %c0_17 = arith.constant 0 : index
    %17 = vector.load %arg5[%c0_15, %c0_16, %c0_17] : memref<4x8x8xf32, #tpu.memory_space<vmem>>, vector<4x8x8xf32>
    tpu.vector_store %arg5[%c0_15, %c0_16, %c0_17], %14 {strides = array<i32>} : memref<4x8x8xf32, #tpu.memory_space<vmem>>, vector<4x8x8xf32>,
    return
  }
  func.func @transform_0(%arg0: i32) -> (i32, i32, i32) {
    %c0_i32 = arith.constant 0 : i32
    %c0_i32_0 = arith.constant 0 : i32
    %c0_i32_1 = arith.constant 0 : i32
    return %arg0, %c0_i32, %c0_i32_0 : i32, i32, i32
  }
  func.func @transform_1(%arg0: i32) -> (i32, i32, i32) {
    %c0_i32 = arith.constant 0 : i32
    %c0_i32_0 = arith.constant 0 : i32
    %c0_i32_1 = arith.constant 0 : i32
    return %arg0, %c0_i32, %c0_i32_0 : i32, i32, i32
  }
  func.func @transform_2(%arg0: i32) -> (i32, i32, i32) {
    %c0_i32 = arith.constant 0 : i32
    %c0_i32_0 = arith.constant 0 : i32
    %c0_i32_1 = arith.constant 0 : i32
    return %arg0, %c0_i32, %c0_i32_0 : i32, i32, i32
  }
  func.func @transform_3(%arg0: i32) -> (i32, i32, i32) {
    %c0_i32 = arith.constant 0 : i32
    %c0_i32_0 = arith.constant 0 : i32
    %c0_i32_1 = arith.constant 0 : i32
    return %arg0, %c0_i32, %c0_i32_0 : i32, i32, i32
  }
  func.func @transform_4(%arg0: i32) -> (i32, i32, i32) {
    %c0_i32 = arith.constant 0 : i32
    %c0_i32_0 = arith.constant 0 : i32
    %c0_i32_1 = arith.constant 0 : i32
    return %arg0, %c0_i32, %c0_i32_0 : i32, i32, i32
  }
}

</mosaic_0001>

<llo_original>
// kernel: tpu_custom_call.1
$region0: #{tpu_custom_call.1}
  #allocation0 [shape = 'u32[]', space=smem, size = 0x4, offset = 0x4, fixed_abs, tag = 'smem constant byte address 0x4 - core index']
  #allocation1 [shape = 'u32[144,128]{1,0:T(1,128)}', space=vmem, size = 0x12000, scoped, tag = 'internal scratch']
  %s0 = inlined_call_operand.hbm [shape: f32[8,8,32], index: 0, kind: input, shape index: {}]
  %s1 = inlined_call_operand.hbm [shape: f32[8,8,32], index: 1, kind: input, shape index: {}]
  %s2 = inlined_call_operand.hbm [shape: f32[8,8,32], index: 2, kind: input, shape index: {}]
  %s3 = inlined_call_operand.hbm [shape: f32[8,8,32], index: 3, kind: output, shape index: {0}]
  %s4 = inlined_call_operand.hbm [shape: f32[8,8,8], index: 4, kind: output, shape index: {1}]
  %5 = xla_tuple %s3, %s4
  %s6 = sld [smem:[#allocation0]]
  $region65: #{tpu_custom_call.1} parent=0
    _
  %s8 = ssub.s32 1, %s6
  %s9 = scalar_select 0, %s8, %s6
  $region1: #{tpu_custom_call.1} parent=0
    #allocation2 [shape = 'u8[32768]{0}', space=vmem, size = 0x8000, scoped, tag = 'input window, operand 0']
    #allocation3 [shape = 's32[2]{0}', space=sflag, size = 0x8, scoped, tag = 'scoped memory for tpu_custom_call.1']
    #allocation4 [shape = 's32[2]{0}', space=sflag, size = 0x8, scoped, tag = 'scoped memory for tpu_custom_call.1']
    #allocation5 [shape = 'u8[32768]{0}', space=vmem, size = 0x8000, scoped, tag = 'input window, operand 1']
    #allocation6 [shape = 's32[2]{0}', space=sflag, size = 0x8, scoped, tag = 'scoped memory for tpu_custom_call.1']
    #allocation7 [shape = 'u8[32768]{0}', space=vmem, size = 0x8000, scoped, tag = 'input window, operand 2']
    #allocation8 [shape = 'u8[32768]{0}', space=vmem, size = 0x8000, scoped, tag = 'output window, operand 0']
    #allocation9 [shape = 'u8[32768]{0}', space=vmem, size = 0x8000, scoped, tag = 'output window, operand 1']
    #allocation10 [shape = 's32[2]{0}', space=sflag, size = 0x8, scoped, tag = 'scoped memory for tpu_custom_call.1']
    %10 = vsyncpa [#allocation3], 0
    %s11 = scalar_lea.sflag [#allocation3], 1
    %12 = vsyncpa %s11, 0
    %13 = vsyncpa [#allocation6], 0
    %s14 = scalar_lea.sflag [#allocation6], 1
    %15 = vsyncpa %s14, 0
    %16 = vsyncpa [#allocation4], 0
    %s17 = scalar_lea.sflag [#allocation4], 1
    %18 = vsyncpa %s17, 0
    %19 = vsyncpa [#allocation10], 0
    %s20 = scalar_lea.sflag [#allocation10], 1
    %21 = vsyncpa %s20, 0
    loop: start=0, step=1, limit=4
    $region2: #{tpu_custom_call.1} parent=1 // loop_pre_header
      _
    $region3: #{tpu_custom_call.1} parent=1 // loop_header
      %s23 = sphi 0, %s27
      %p24 = scmp.ge.s32.totalorder %s23, 4
      %s33 = sphi 0, %s35
      %s36 = sphi 0, %s33
      %s37 = sphi 0, %s36
      %s53 = sphi 0, %s37
      %s59 = sphi 0, %s61
      %s62 = sphi 0, %s59
      %s63 = sphi 0, %s62
      %s79 = sphi 0, %s63
      %s85 = sphi 0, %s87
      %s88 = sphi 0, %s85
      %s89 = sphi 0, %s88
      %s105 = sphi 0, %s89
      %s111 = sphi 0, %s113
      %s114 = sphi 0, %s111
      %s115 = sphi 0, %s114
      %s131 = sphi 0, %s115
      %s137 = sphi 0, %s139
      %s140 = sphi 0, %s137
      %s141 = sphi 0, %s140
      %s157 = sphi 0, %s141
    $region4: #{tpu_custom_call.1} parent=1 // loop_header_branch
      %26 = sbr.rel (%p24) target = $region8
    $region5: #{tpu_custom_call.1} parent=1 // loop_body
      %s28 = ssub.s32 %s23, 1
      %s29 = ssub.s32 %s23, 2
      %s30 = sadd.s32 %s23, 1
      %s31 = ssub.s32 %s23, %s30
      %p32 = scmp.eq.s32.totalorder %s31, 0
      %s34 = sadd.s32 %s33, 1
      %s35 = scalar_select %p32, %s33, %s34
      %p38 = pneg %p32
      %p39 = scmp.eq.s32.totalorder %s23, 1
      %p40 = por %p38, %p39
      %p41 = scmp.ne.s32.totalorder %s33, %s36
      %p42 = scmp.eq.s32.totalorder %s23, 0
      %p43 = por %p41, %p42
      %p44 = scmp.ne.s32.totalorder %s33, %s36
      %p45 = scmp.eq.s32.totalorder %s28, 1
      %p46 = por %p44, %p45
      %p47 = scmp.ne.s32.totalorder %s36, %s37
      %p48 = scmp.eq.s32.totalorder %s28, 0
      %p49 = por %p47, %p48
      %p50 = scmp.ne.s32.totalorder %s36, %s37
      %p51 = scmp.eq.s32.totalorder %s29, 1
      %p52 = por %p50, %p51
      %p54 = scmp.ne.s32.totalorder %s37, %s53
      %p55 = scmp.eq.s32.totalorder %s29, 0
      %p56 = por %p54, %p55
      %s57 = ssub.s32 %s23, %s30
      %p58 = scmp.eq.s32.totalorder %s57, 0
      %s60 = sadd.s32 %s59, 1
      %s61 = scalar_select %p58, %s59, %s60
      %p64 = pneg %p58
      %p65 = scmp.eq.s32.totalorder %s23, 1
      %p66 = por %p64, %p65
      %p67 = scmp.ne.s32.totalorder %s59, %s62
      %p68 = scmp.eq.s32.totalorder %s23, 0
      %p69 = por %p67, %p68
      %p70 = scmp.ne.s32.totalorder %s59, %s62
      %p71 = scmp.eq.s32.totalorder %s28, 1
      %p72 = por %p70, %p71
      %p73 = scmp.ne.s32.totalorder %s62, %s63
      %p74 = scmp.eq.s32.totalorder %s28, 0
      %p75 = por %p73, %p74
      %p76 = scmp.ne.s32.totalorder %s62, %s63
      %p77 = scmp.eq.s32.totalorder %s29, 1
      %p78 = por %p76, %p77
      %p80 = scmp.ne.s32.totalorder %s63, %s79
      %p81 = scmp.eq.s32.totalorder %s29, 0
      %p82 = por %p80, %p81
      %s83 = ssub.s32 %s23, %s30
      %p84 = scmp.eq.s32.totalorder %s83, 0
      %s86 = sadd.s32 %s85, 1
      %s87 = scalar_select %p84, %s85, %s86
      %p90 = pneg %p84
      %p91 = scmp.eq.s32.totalorder %s23, 1
      %p92 = por %p90, %p91
      %p93 = scmp.ne.s32.totalorder %s85, %s88
      %p94 = scmp.eq.s32.totalorder %s23, 0
      %p95 = por %p93, %p94
      %p96 = scmp.ne.s32.totalorder %s85, %s88
      %p97 = scmp.eq.s32.totalorder %s28, 1
      %p98 = por %p96, %p97
      %p99 = scmp.ne.s32.totalorder %s88, %s89
      %p100 = scmp.eq.s32.totalorder %s28, 0
      %p101 = por %p99, %p100
      %p102 = scmp.ne.s32.totalorder %s88, %s89
      %p103 = scmp.eq.s32.totalorder %s29, 1
      %p104 = por %p102, %p103
      %p106 = scmp.ne.s32.totalorder %s89, %s105
      %p107 = scmp.eq.s32.totalorder %s29, 0
      %p108 = por %p106, %p107
      %s109 = ssub.s32 %s23, %s30
      %p110 = scmp.eq.s32.totalorder %s109, 0
      %s112 = sadd.s32 %s111, 1
      %s113 = scalar_select %p110, %s111, %s112
      %p116 = pneg %p110
      %p117 = scmp.eq.s32.totalorder %s23, 1
      %p118 = por %p116, %p117
      %p119 = scmp.ne.s32.totalorder %s111, %s114
      %p120 = scmp.eq.s32.totalorder %s23, 0
      %p121 = por %p119, %p120
      %p122 = scmp.ne.s32.totalorder %s111, %s114
      %p123 = scmp.eq.s32.totalorder %s28, 1
      %p124 = por %p122, %p123
      %p125 = scmp.ne.s32.totalorder %s114, %s115
      %p126 = scmp.eq.s32.totalorder %s28, 0
      %p127 = por %p125, %p126
      %p128 = scmp.ne.s32.totalorder %s114, %s115
      %p129 = scmp.eq.s32.totalorder %s29, 1
      %p130 = por %p128, %p129
      %p132 = scmp.ne.s32.totalorder %s115, %s131
      %p133 = scmp.eq.s32.totalorder %s29, 0
      %p134 = por %p132, %p133
      %s135 = ssub.s32 %s23, %s30
      %p136 = scmp.eq.s32.totalorder %s135, 0
      %s138 = sadd.s32 %s137, 1
      %s139 = scalar_select %p136, %s137, %s138
      %p142 = pneg %p136
      %p143 = scmp.eq.s32.totalorder %s23, 1
      %p144 = por %p142, %p143
      %p145 = scmp.ne.s32.totalorder %s137, %s140
      %p146 = scmp.eq.s32.totalorder %s23, 0
      %p147 = por %p145, %p146
      %p148 = scmp.ne.s32.totalorder %s137, %s140
      %p149 = scmp.eq.s32.totalorder %s28, 1
      %p150 = por %p148, %p149
      %p151 = scmp.ne.s32.totalorder %s140, %s141
      %p152 = scmp.eq.s32.totalorder %s28, 0
      %p153 = por %p151, %p152
      %p154 = scmp.ne.s32.totalorder %s140, %s141
      %p155 = scmp.eq.s32.totalorder %s29, 1
      %p156 = por %p154, %p155
      %p158 = scmp.ne.s32.totalorder %s141, %s157
      %p159 = scmp.eq.s32.totalorder %s29, 0
      %p160 = por %p158, %p159
      %p161 = scmp.le.s32.totalorder 1, %s23
      %p162 = scmp.lt.s32.totalorder %s23, 3
      %p163 = pnand %p161, %p162
      %p164 = pneg %p163
      // Predicated region
      $region9: #{tpu_custom_call.1} parent=5 // pred_check
        _
      $region10: #{tpu_custom_call.1} parent=5 // pred_check_branch
        %166 = sbr.rel (%p163) target = $region12
      $region11: #{tpu_custom_call.1} parent=5 // pred_region
        %s167 = ssub.s32 %s23, 1
      $region12: #{tpu_custom_call.1} parent=5 // pred_fallthru
        _
      %p168 = scmp.lt.s32.totalorder %s23, 2
      // Predicated region
      $region13: #{tpu_custom_call.1} parent=5 // pred_check
        %p169 = pneg %p168
      $region14: #{tpu_custom_call.1} parent=5 // pred_check_branch
        %171 = sbr.rel (%p169) target = $region16
      $region15: #{tpu_custom_call.1} parent=5 // pred_region
        // Predicated region
        $region17: #{tpu_custom_call.1} parent=15 // pred_check
          %p172 = pneg %p43
        $region18: #{tpu_custom_call.1} parent=15 // pred_check_branch
          %174 = sbr.rel (%p172) target = $region20
        $region19: #{tpu_custom_call.1} parent=15 // pred_region
          %s175 = sand.u32 %s33, 1
          %s176 = scalar_lea.sflag [#allocation3], %s175
          %s177 = sand.u32 %s33, 1
          %s178 = smul.addr %s177, 32
          %s179 = scalar_lea.vmem [#allocation2], %s178
          %s180 = smul.u32 4, %s23
          %s182 = ssub.s32 512, 512
          %183 = vsyncadd %s176, %s182
          %s184 = smul.addr %s180, 128
          %s185 = scalar_lea.hbm %s0, %s184
          %s186 = sshll.u32 %s179, 4
          %s187 = int_to_ptr.vmem [resolvable:$true] %s186
          %192 = dma.hbm_to_vmem [thread:$0]  %s185, 512, %s187, %s176, 128, 128, 8
        $region20: #{tpu_custom_call.1} parent=15 // pred_fallthru
          _
        // Predicated region
        $region21: #{tpu_custom_call.1} parent=15 // pred_check
          %p193 = pneg %p69
        $region22: #{tpu_custom_call.1} parent=15 // pred_check_branch
          %195 = sbr.rel (%p193) target = $region24
        $region23: #{tpu_custom_call.1} parent=15 // pred_region
          %s196 = sand.u32 %s23, 1
          %s197 = scalar_lea.sflag [#allocation6], %s196
          %s198 = sand.u32 %s59, 1
          %s199 = smul.addr %s198, 32
          %s200 = scalar_lea.vmem [#allocation5], %s199
          %s201 = smul.u32 4, %s23
          %s203 = ssub.s32 512, 512
          %204 = vsyncadd %s197, %s203
          %s205 = smul.addr %s201, 128
          %s206 = scalar_lea.hbm %s1, %s205
          %s207 = sshll.u32 %s200, 4
          %s208 = int_to_ptr.vmem [resolvable:$true] %s207
          %213 = dma.hbm_to_vmem [thread:$0]  %s206, 512, %s208, %s197, 128, 128, 8
        $region24: #{tpu_custom_call.1} parent=15 // pred_fallthru
          _
        // Predicated region
        $region25: #{tpu_custom_call.1} parent=15 // pred_check
          %p214 = pneg %p95
        $region26: #{tpu_custom_call.1} parent=15 // pred_check_branch
          %216 = sbr.rel (%p214) target = $region28
        $region27: #{tpu_custom_call.1} parent=15 // pred_region
          %s217 = sand.u32 %s23, 1
          %s218 = scalar_lea.sflag [#allocation6], %s217
          %s219 = sand.u32 %s85, 1
          %s220 = smul.addr %s219, 32
          %s221 = scalar_lea.vmem [#allocation7], %s220
          %s222 = smul.u32 4, %s23
          %s224 = ssub.s32 512, 512
          %225 = vsyncadd %s218, %s224
          %s226 = smul.addr %s222, 128
          %s227 = scalar_lea.hbm %s2, %s226
          %s228 = sshll.u32 %s221, 4
          %s229 = int_to_ptr.vmem [resolvable:$true] %s228
          %234 = dma.hbm_to_vmem [thread:$0]  %s227, 512, %s229, %s218, 128, 128, 8
        $region28: #{tpu_custom_call.1} parent=15 // pred_fallthru
          _
      $region16: #{tpu_custom_call.1} parent=5 // pred_fallthru
        _
      %p235 = scmp.le.s32.totalorder 1, %s23
      %p236 = scmp.lt.s32.totalorder %s23, 3
      %p237 = pnand %p235, %p236
      %p238 = pneg %p237
      // Predicated region
      $region29: #{tpu_custom_call.1} parent=5 // pred_check
        _
      $region30: #{tpu_custom_call.1} parent=5 // pred_check_branch
        %240 = sbr.rel (%p237) target = $region32
      $region31: #{tpu_custom_call.1} parent=5 // pred_region
        %s241 = ssub.s32 %s23, 1
        %s242 = sand.u32 %s36, 1
        %s243 = scalar_lea.sflag [#allocation3], %s242
        %s244 = sand.u32 %s36, 1
        %s245 = smul.addr %s244, 32
        %s246 = scalar_lea.vmem [#allocation2], %s245
        // Predicated region
        $region33: #{tpu_custom_call.1} parent=31 // pred_check
          %p247 = pneg %p49
        $region34: #{tpu_custom_call.1} parent=31 // pred_check_branch
          %249 = sbr.rel (%p247) target = $region36
        $region35: #{tpu_custom_call.1} parent=31 // pred_region
          %250 = dma.done %s243, 512
        $region36: #{tpu_custom_call.1} parent=31 // pred_fallthru
          _
        %s251 = sand.u32 %s28, 1
        %s252 = scalar_lea.sflag [#allocation6], %s251
        %s253 = sand.u32 %s62, 1
        %s254 = smul.addr %s253, 32
        %s255 = scalar_lea.vmem [#allocation5], %s254
        // Predicated region
        $region37: #{tpu_custom_call.1} parent=31 // pred_check
          %p256 = pneg %p75
        $region38: #{tpu_custom_call.1} parent=31 // pred_check_branch
          %258 = sbr.rel (%p256) target = $region40
        $region39: #{tpu_custom_call.1} parent=31 // pred_region
          %259 = dma.done %s252, 512
        $region40: #{tpu_custom_call.1} parent=31 // pred_fallthru
          _
        %s260 = sand.u32 %s28, 1
        %s261 = scalar_lea.sflag [#allocation6], %s260
        %s262 = sand.u32 %s88, 1
        %s263 = smul.addr %s262, 32
        %s264 = scalar_lea.vmem [#allocation7], %s263
        // Predicated region
        $region41: #{tpu_custom_call.1} parent=31 // pred_check
          %p265 = pneg %p101
        $region42: #{tpu_custom_call.1} parent=31 // pred_check_branch
          %267 = sbr.rel (%p265) target = $region44
        $region43: #{tpu_custom_call.1} parent=31 // pred_region
          %268 = dma.done %s261, 512
        $region44: #{tpu_custom_call.1} parent=31 // pred_fallthru
          _
        %s269 = sand.u32 %s36, 1
        %s270 = scalar_lea.sflag [#allocation3], %s269
        %s271 = sand.u32 %s36, 1
        %s272 = smul.addr %s271, 32
        %s273 = scalar_lea.vmem [#allocation2], %s272
        %p274 = pneg %p49
        %p275 = pneg %p46
        %s276 = sand.u32 %s28, 1
        %s277 = scalar_lea.sflag [#allocation6], %s276
        %s278 = sand.u32 %s62, 1
        %s279 = smul.addr %s278, 32
        %s280 = scalar_lea.vmem [#allocation5], %s279
        %p281 = pneg %p75
        %p282 = pneg %p72
        %s283 = sand.u32 %s28, 1
        %s284 = scalar_lea.sflag [#allocation6], %s283
        %s285 = sand.u32 %s88, 1
        %s286 = smul.addr %s285, 32
        %s287 = scalar_lea.vmem [#allocation7], %s286
        %p288 = pneg %p101
        %p289 = pneg %p98
        %p290 = pneg %p127
        %p291 = pneg %p124
        %s292 = sand.u32 %s114, 1
        %s293 = scalar_lea.sflag [#allocation4], %s292
        %s294 = sand.u32 %s114, 1
        %s295 = smul.addr %s294, 32
        %s296 = scalar_lea.vmem [#allocation8], %s295
        %p297 = pneg %p153
        %p298 = pneg %p150
        %s299 = sand.u32 %s140, 1
        %s300 = scalar_lea.sflag [#allocation10], %s299
        %s301 = sand.u32 %s140, 1
        %s302 = smul.addr %s301, 32
        %s303 = scalar_lea.vmem [#allocation9], %s302
        %s304 = smul.u32 4, %s28
        %s305 = smul.u32 4, %s28
        %s306 = smul.u32 4, %s28
        %s307 = smul.u32 4, %s28
        %s308 = smul.u32 4, %s28
        %v309 = vld [vmem:[%s246] sm:$0xff]
        %v310 = vld [vmem:[%s246 + $0x8] sm:$0xff]
        %v311 = vld [vmem:[%s246 + $0x10] sm:$0xff]
        %v312 = vld [vmem:[%s246 + $0x18] sm:$0xff]
        %v313 = vld [vmem:[%s255] sm:$0xff]
        %v314 = vld [vmem:[%s255 + $0x8] sm:$0xff]
        %v315 = vld [vmem:[%s255 + $0x10] sm:$0xff]
        %v316 = vld [vmem:[%s255 + $0x18] sm:$0xff]
        %v317 = vld [vmem:[%s264] sm:$0xff]
        %v318 = vld [vmem:[%s264 + $0x8] sm:$0xff]
        %v319 = vld [vmem:[%s264 + $0x10] sm:$0xff]
        %v320 = vld [vmem:[%s264 + $0x18] sm:$0xff]
        %vm321 = vcmask 261120
        %v323 = vsel %vm321, %v309, 0
        %v326 = vsel %vm321, %v313, 0
        %328 = vmatprep.subr.mxu0 0.0
        %329 = vmatpush1.xpose.msra.mxu0 0.0
        %330 = vmatprep.subr.mxu0 0.0
        %331 = vmatpush1.xpose.msra.mxu0 0.0
        %332 = vmatprep.subr.mxu0 0.0
        %333 = vmatpush1.xpose.msra.mxu0 0.0
        %334 = vmatprep.subr.mxu0 0.0
        %335 = vmatpush1.xpose.msra.mxu0 0.0
        %336 = vmatprep.subr.mxu0 0.0
        %337 = vmatpush1.xpose.msra.mxu0 0.0
        %338 = vmatprep.subr.mxu0 0.0
        %339 = vmatpush1.xpose.msra.mxu0 0.0
        %340 = vmatprep.subr.mxu0 0.0
        %341 = vmatpush1.xpose.msra.mxu0 0.0
        %342 = vmatprep.subr.mxu0 0.0
        %343 = vmatpush1.xpose.msra.mxu0 0.0
        %344 = vmatprep.subr.mxu0 0.0
        %345 = vmatpush1.xpose.msra.mxu0 0.0
        %346 = vmatprep.subr.mxu0 0.0
        %347 = vmatpush1.xpose.msra.mxu0 0.0
        %348 = vmatprep.subr.mxu0 0.0
        %349 = vmatpush1.xpose.msra.mxu0 0.0
        %350 = vmatprep.subr.mxu0 0.0
        %351 = vmatpush1.xpose.msra.mxu0 0.0
        %352 = vmatprep.subr.mxu0 0.0
        %353 = vmatpush1.xpose.msra.mxu0 0.0
        %354 = vmatprep.subr.mxu0 0.0
        %355 = vmatpush1.xpose.msra.mxu0 0.0
        %356 = vmatprep.subr.mxu0 0.0
        %357 = vmatpush1.xpose.msra.mxu0 0.0
        %358 = vmatprep.subr.mxu0 0.0
        %359 = vmatpush1.xpose.msra.mxu0 %v326
        %360 = vmatprep.subr.mxu0 0.0
        %361 = vmatpush2.xpose.msra.mxu0 0.0
        %362 = vmatprep.subr.mxu0 0.0
        %363 = vmatpush2.xpose.msra.mxu0 0.0
        %364 = vmatprep.subr.mxu0 0.0
        %365 = vmatpush2.xpose.msra.mxu0 0.0
        %366 = vmatprep.subr.mxu0 0.0
        %367 = vmatpush2.xpose.msra.mxu0 0.0
        %368 = vmatprep.subr.mxu0 0.0
        %369 = vmatpush2.xpose.msra.mxu0 0.0
        %370 = vmatprep.subr.mxu0 0.0
        %371 = vmatpush2.xpose.msra.mxu0 0.0
        %372 = vmatprep.subr.mxu0 0.0
        %373 = vmatpush2.xpose.msra.mxu0 0.0
        %374 = vmatprep.subr.mxu0 0.0
        %375 = vmatpush2.xpose.msra.mxu0 0.0
        %376 = vmatprep.subr.mxu0 0.0
        %377 = vmatpush2.xpose.msra.mxu0 0.0
        %378 = vmatprep.subr.mxu0 0.0
        %379 = vmatpush2.xpose.msra.mxu0 0.0
        %380 = vmatprep.subr.mxu0 0.0
        %381 = vmatpush2.xpose.msra.mxu0 0.0
        %382 = vmatprep.subr.mxu0 0.0
        %383 = vmatpush2.xpose.msra.mxu0 0.0
        %384 = vmatprep.subr.mxu0 0.0
        %385 = vmatpush2.xpose.msra.mxu0 0.0
        %386 = vmatprep.subr.mxu0 0.0
        %387 = vmatpush2.xpose.msra.mxu0 0.0
        %388 = vmatprep.subr.mxu0 0.0
        %389 = vmatpush2.xpose.msra.mxu0 0.0
        %390 = vmatprep.subr.mxu0 0.0
        %391 = vmatpush2.xpose.msra.mxu0 0.0
        %392 = vmatprep.mubr.f32.mxu0 0.0
        %393 = vmatmul.mubr.f32.gmra.mxu0 %v323
        %v394 = vpop.f32.mrf.mxu0
        %v395 = vadd.f32 0.0, %v394
        %v396 = vpop.f32.mrf.mxu0
        %397 = vdwg.mxu0
        %v399 = vsel %vm321, %v310, 0
        %v402 = vsel %vm321, %v314, 0
        %404 = vmatprep.subr.mxu0 0.0
        %405 = vmatpush1.xpose.msra.mxu0 0.0
        %406 = vmatprep.subr.mxu0 0.0
        %407 = vmatpush1.xpose.msra.mxu0 0.0
        %408 = vmatprep.subr.mxu0 0.0
        %409 = vmatpush1.xpose.msra.mxu0 0.0
        %410 = vmatprep.subr.mxu0 0.0
        %411 = vmatpush1.xpose.msra.mxu0 0.0
        %412 = vmatprep.subr.mxu0 0.0
        %413 = vmatpush1.xpose.msra.mxu0 0.0
        %414 = vmatprep.subr.mxu0 0.0
        %415 = vmatpush1.xpose.msra.mxu0 0.0
        %416 = vmatprep.subr.mxu0 0.0
        %417 = vmatpush1.xpose.msra.mxu0 0.0
        %418 = vmatprep.subr.mxu0 0.0
        %419 = vmatpush1.xpose.msra.mxu0 0.0
        %420 = vmatprep.subr.mxu0 0.0
        %421 = vmatpush1.xpose.msra.mxu0 0.0
        %422 = vmatprep.subr.mxu0 0.0
        %423 = vmatpush1.xpose.msra.mxu0 0.0
        %424 = vmatprep.subr.mxu0 0.0
        %425 = vmatpush1.xpose.msra.mxu0 0.0
        %426 = vmatprep.subr.mxu0 0.0
        %427 = vmatpush1.xpose.msra.mxu0 0.0
        %428 = vmatprep.subr.mxu0 0.0
        %429 = vmatpush1.xpose.msra.mxu0 0.0
        %430 = vmatprep.subr.mxu0 0.0
        %431 = vmatpush1.xpose.msra.mxu0 0.0
        %432 = vmatprep.subr.mxu0 0.0
        %433 = vmatpush1.xpose.msra.mxu0 0.0
        %434 = vmatprep.subr.mxu0 0.0
        %435 = vmatpush1.xpose.msra.mxu0 %v402
        %436 = vmatprep.subr.mxu0 0.0
        %437 = vmatpush2.xpose.msra.mxu0 0.0
        %438 = vmatprep.subr.mxu0 0.0
        %439 = vmatpush2.xpose.msra.mxu0 0.0
        %440 = vmatprep.subr.mxu0 0.0
        %441 = vmatpush2.xpose.msra.mxu0 0.0
        %442 = vmatprep.subr.mxu0 0.0
        %443 = vmatpush2.xpose.msra.mxu0 0.0
        %444 = vmatprep.subr.mxu0 0.0
        %445 = vmatpush2.xpose.msra.mxu0 0.0
        %446 = vmatprep.subr.mxu0 0.0
        %447 = vmatpush2.xpose.msra.mxu0 0.0
        %448 = vmatprep.subr.mxu0 0.0
        %449 = vmatpush2.xpose.msra.mxu0 0.0
        %450 = vmatprep.subr.mxu0 0.0
        %451 = vmatpush2.xpose.msra.mxu0 0.0
        %452 = vmatprep.subr.mxu0 0.0
        %453 = vmatpush2.xpose.msra.mxu0 0.0
        %454 = vmatprep.subr.mxu0 0.0
        %455 = vmatpush2.xpose.msra.mxu0 0.0
        %456 = vmatprep.subr.mxu0 0.0
        %457 = vmatpush2.xpose.msra.mxu0 0.0
        %458 = vmatprep.subr.mxu0 0.0
        %459 = vmatpush2.xpose.msra.mxu0 0.0
        %460 = vmatprep.subr.mxu0 0.0
        %461 = vmatpush2.xpose.msra.mxu0 0.0
        %462 = vmatprep.subr.mxu0 0.0
        %463 = vmatpush2.xpose.msra.mxu0 0.0
        %464 = vmatprep.subr.mxu0 0.0
        %465 = vmatpush2.xpose.msra.mxu0 0.0
        %466 = vmatprep.subr.mxu0 0.0
        %467 = vmatpush2.xpose.msra.mxu0 0.0
        %468 = vmatprep.mubr.f32.mxu0 0.0
        %469 = vmatmul.mubr.f32.gmra.mxu0 %v399
        %v470 = vpop.f32.mrf.mxu0
        %v471 = vadd.f32 0.0, %v470
        %v472 = vpop.f32.mrf.mxu0
        %473 = vdwg.mxu0
        %v475 = vsel %vm321, %v311, 0
        %v478 = vsel %vm321, %v315, 0
        %480 = vmatprep.subr.mxu0 0.0
        %481 = vmatpush1.xpose.msra.mxu0 0.0
        %482 = vmatprep.subr.mxu0 0.0
        %483 = vmatpush1.xpose.msra.mxu0 0.0
        %484 = vmatprep.subr.mxu0 0.0
        %485 = vmatpush1.xpose.msra.mxu0 0.0
        %486 = vmatprep.subr.mxu0 0.0
        %487 = vmatpush1.xpose.msra.mxu0 0.0
        %488 = vmatprep.subr.mxu0 0.0
        %489 = vmatpush1.xpose.msra.mxu0 0.0
        %490 = vmatprep.subr.mxu0 0.0
        %491 = vmatpush1.xpose.msra.mxu0 0.0
        %492 = vmatprep.subr.mxu0 0.0
        %493 = vmatpush1.xpose.msra.mxu0 0.0
        %494 = vmatprep.subr.mxu0 0.0
        %495 = vmatpush1.xpose.msra.mxu0 0.0
        %496 = vmatprep.subr.mxu0 0.0
        %497 = vmatpush1.xpose.msra.mxu0 0.0
        %498 = vmatprep.subr.mxu0 0.0
        %499 = vmatpush1.xpose.msra.mxu0 0.0
        %500 = vmatprep.subr.mxu0 0.0
        %501 = vmatpush1.xpose.msra.mxu0 0.0
        %502 = vmatprep.subr.mxu0 0.0
        %503 = vmatpush1.xpose.msra.mxu0 0.0
        %504 = vmatprep.subr.mxu0 0.0
        %505 = vmatpush1.xpose.msra.mxu0 0.0
        %506 = vmatprep.subr.mxu0 0.0
        %507 = vmatpush1.xpose.msra.mxu0 0.0
        %508 = vmatprep.subr.mxu0 0.0
        %509 = vmatpush1.xpose.msra.mxu0 0.0
        %510 = vmatprep.subr.mxu0 0.0
        %511 = vmatpush1.xpose.msra.mxu0 %v478
        %512 = vmatprep.subr.mxu0 0.0
        %513 = vmatpush2.xpose.msra.mxu0 0.0
        %514 = vmatprep.subr.mxu0 0.0
        %515 = vmatpush2.xpose.msra.mxu0 0.0
        %516 = vmatprep.subr.mxu0 0.0
        %517 = vmatpush2.xpose.msra.mxu0 0.0
        %518 = vmatprep.subr.mxu0 0.0
        %519 = vmatpush2.xpose.msra.mxu0 0.0
        %520 = vmatprep.subr.mxu0 0.0
        %521 = vmatpush2.xpose.msra.mxu0 0.0
        %522 = vmatprep.subr.mxu0 0.0
        %523 = vmatpush2.xpose.msra.mxu0 0.0
        %524 = vmatprep.subr.mxu0 0.0
        %525 = vmatpush2.xpose.msra.mxu0 0.0
        %526 = vmatprep.subr.mxu0 0.0
        %527 = vmatpush2.xpose.msra.mxu0 0.0
        %528 = vmatprep.subr.mxu0 0.0
        %529 = vmatpush2.xpose.msra.mxu0 0.0
        %530 = vmatprep.subr.mxu0 0.0
        %531 = vmatpush2.xpose.msra.mxu0 0.0
        %532 = vmatprep.subr.mxu0 0.0
        %533 = vmatpush2.xpose.msra.mxu0 0.0
        %534 = vmatprep.subr.mxu0 0.0
        %535 = vmatpush2.xpose.msra.mxu0 0.0
        %536 = vmatprep.subr.mxu0 0.0
        %537 = vmatpush2.xpose.msra.mxu0 0.0
        %538 = vmatprep.subr.mxu0 0.0
        %539 = vmatpush2.xpose.msra.mxu0 0.0
        %540 = vmatprep.subr.mxu0 0.0
        %541 = vmatpush2.xpose.msra.mxu0 0.0
        %542 = vmatprep.subr.mxu0 0.0
        %543 = vmatpush2.xpose.msra.mxu0 0.0
        %544 = vmatprep.mubr.f32.mxu0 0.0
        %545 = vmatmul.mubr.f32.gmra.mxu0 %v475
        %v546 = vpop.f32.mrf.mxu0
        %v547 = vadd.f32 0.0, %v546
        %v548 = vpop.f32.mrf.mxu0
        %549 = vdwg.mxu0
        %v551 = vsel %vm321, %v312, 0
        %v554 = vsel %vm321, %v316, 0
        %556 = vmatprep.subr.mxu0 0.0
        %557 = vmatpush1.xpose.msra.mxu0 0.0
        %558 = vmatprep.subr.mxu0 0.0
        %559 = vmatpush1.xpose.msra.mxu0 0.0
        %560 = vmatprep.subr.mxu0 0.0
        %561 = vmatpush1.xpose.msra.mxu0 0.0
        %562 = vmatprep.subr.mxu0 0.0
        %563 = vmatpush1.xpose.msra.mxu0 0.0
        %564 = vmatprep.subr.mxu0 0.0
        %565 = vmatpush1.xpose.msra.mxu0 0.0
        %566 = vmatprep.subr.mxu0 0.0
        %567 = vmatpush1.xpose.msra.mxu0 0.0
        %568 = vmatprep.subr.mxu0 0.0
        %569 = vmatpush1.xpose.msra.mxu0 0.0
        %570 = vmatprep.subr.mxu0 0.0
        %571 = vmatpush1.xpose.msra.mxu0 0.0
        %572 = vmatprep.subr.mxu0 0.0
        %573 = vmatpush1.xpose.msra.mxu0 0.0
        %574 = vmatprep.subr.mxu0 0.0
        %575 = vmatpush1.xpose.msra.mxu0 0.0
        %576 = vmatprep.subr.mxu0 0.0
        %577 = vmatpush1.xpose.msra.mxu0 0.0
        %578 = vmatprep.subr.mxu0 0.0
        %579 = vmatpush1.xpose.msra.mxu0 0.0
        %580 = vmatprep.subr.mxu0 0.0
        %581 = vmatpush1.xpose.msra.mxu0 0.0
        %582 = vmatprep.subr.mxu0 0.0
        %583 = vmatpush1.xpose.msra.mxu0 0.0
        %584 = vmatprep.subr.mxu0 0.0
        %585 = vmatpush1.xpose.msra.mxu0 0.0
        %586 = vmatprep.subr.mxu0 0.0
        %587 = vmatpush1.xpose.msra.mxu0 %v554
        %588 = vmatprep.subr.mxu0 0.0
        %589 = vmatpush2.xpose.msra.mxu0 0.0
        %590 = vmatprep.subr.mxu0 0.0
        %591 = vmatpush2.xpose.msra.mxu0 0.0
        %592 = vmatprep.subr.mxu0 0.0
        %593 = vmatpush2.xpose.msra.mxu0 0.0
        %594 = vmatprep.subr.mxu0 0.0
        %595 = vmatpush2.xpose.msra.mxu0 0.0
        %596 = vmatprep.subr.mxu0 0.0
        %597 = vmatpush2.xpose.msra.mxu0 0.0
        %598 = vmatprep.subr.mxu0 0.0
        %599 = vmatpush2.xpose.msra.mxu0 0.0
        %600 = vmatprep.subr.mxu0 0.0
        %601 = vmatpush2.xpose.msra.mxu0 0.0
        %602 = vmatprep.subr.mxu0 0.0
        %603 = vmatpush2.xpose.msra.mxu0 0.0
        %604 = vmatprep.subr.mxu0 0.0
        %605 = vmatpush2.xpose.msra.mxu0 0.0
        %606 = vmatprep.subr.mxu0 0.0
        %607 = vmatpush2.xpose.msra.mxu0 0.0
        %608 = vmatprep.subr.mxu0 0.0
        %609 = vmatpush2.xpose.msra.mxu0 0.0
        %610 = vmatprep.subr.mxu0 0.0
        %611 = vmatpush2.xpose.msra.mxu0 0.0
        %612 = vmatprep.subr.mxu0 0.0
        %613 = vmatpush2.xpose.msra.mxu0 0.0
        %614 = vmatprep.subr.mxu0 0.0
        %615 = vmatpush2.xpose.msra.mxu0 0.0
        %616 = vmatprep.subr.mxu0 0.0
        %617 = vmatpush2.xpose.msra.mxu0 0.0
        %618 = vmatprep.subr.mxu0 0.0
        %619 = vmatpush2.xpose.msra.mxu0 0.0
        %620 = vmatprep.mubr.f32.mxu0 0.0
        %621 = vmatmul.mubr.f32.gmra.mxu0 %v551
        %v622 = vpop.f32.mrf.mxu0
        %v623 = vadd.f32 0.0, %v622
        %v624 = vpop.f32.mrf.mxu0
        %625 = vdwg.mxu0
        %v626 = vmul.f32 %v395, 0.17677669
        %v627 = vmul.f32 %v471, 0.17677669
        %v628 = vmul.f32 %v547, 0.17677669
        %v629 = vmul.f32 %v623, 0.17677669
        %vm630 = vcmask 64512
        %v631 = vsel %vm630, %v626, -inf
        %632 = vmax.xlane.f32.xlu0 %v631
        %v633 = vpop.xlane.xlu0 %632
        %v634 = vsel %vm630, %v627, -inf
        %635 = vmax.xlane.f32.xlu0 %v634
        %v636 = vpop.xlane.xlu0 %635
        %v637 = vsel %vm630, %v628, -inf
        %638 = vmax.xlane.f32.xlu0 %v637
        %v639 = vpop.xlane.xlu0 %638
        %v640 = vsel %vm630, %v629, -inf
        %641 = vmax.xlane.f32.xlu0 %v640
        %v642 = vpop.xlane.xlu0 %641
        %v643 = vsub.f32 %v626, %v633
        %v644 = vsub.f32 %v627, %v636
        %v645 = vsub.f32 %v628, %v639
        %v646 = vsub.f32 %v629, %v642
        %v647 = vmul.f32 %v643, 1.442695
        %v648 = vpow.pop %v647
        %v649 = vmul.f32 %v644, 1.442695
        %v650 = vpow.pop %v649
        %v651 = vmul.f32 %v645, 1.442695
        %v652 = vpow.pop %v651
        %v653 = vmul.f32 %v646, 1.442695
        %v654 = vpow.pop %v653
        %v655 = vsel %vm630, %v648, 0.0
        %656 = vadd.xlane.f32.xlu0 %v655
        %v657 = vpop.xlane.xlu0 %656
        %v658 = vsel %vm630, %v650, 0.0
        %659 = vadd.xlane.f32.xlu0 %v658
        %v660 = vpop.xlane.xlu0 %659
        %v661 = vsel %vm630, %v652, 0.0
        %662 = vadd.xlane.f32.xlu0 %v661
        %v663 = vpop.xlane.xlu0 %662
        %v664 = vsel %vm630, %v654, 0.0
        %665 = vadd.xlane.f32.xlu0 %v664
        %v666 = vpop.xlane.xlu0 %665
        %v667 = vrcp.pop %v657
        %v668 = vmul.f32 %v648, %v667
        %v669 = vrcp.pop %v660
        %v670 = vmul.f32 %v650, %v669
        %v671 = vrcp.pop %v663
        %v672 = vmul.f32 %v652, %v671
        %v673 = vrcp.pop %v666
        %v674 = vmul.f32 %v654, %v673
        %v676 = vsel %vm630, %v668, 0
        %678 = vmatprep.subr.mxu0 0.0
        %679 = vmatpush1.msra.mxu0 0.0
        %680 = vmatprep.subr.mxu0 0.0
        %681 = vmatpush1.msra.mxu0 0.0
        %682 = vmatprep.subr.mxu0 0.0
        %683 = vmatpush1.msra.mxu0 0.0
        %684 = vmatprep.subr.mxu0 0.0
        %685 = vmatpush1.msra.mxu0 0.0
        %686 = vmatprep.subr.mxu0 0.0
        %687 = vmatpush1.msra.mxu0 0.0
        %688 = vmatprep.subr.mxu0 0.0
        %689 = vmatpush1.msra.mxu0 0.0
        %690 = vmatprep.subr.mxu0 0.0
        %691 = vmatpush1.msra.mxu0 0.0
        %692 = vmatprep.subr.mxu0 0.0
        %693 = vmatpush1.msra.mxu0 0.0
        %694 = vmatprep.subr.mxu0 0.0
        %695 = vmatpush1.msra.mxu0 0.0
        %696 = vmatprep.subr.mxu0 0.0
        %697 = vmatpush1.msra.mxu0 0.0
        %698 = vmatprep.subr.mxu0 0.0
        %699 = vmatpush1.msra.mxu0 0.0
        %700 = vmatprep.subr.mxu0 0.0
        %701 = vmatpush1.msra.mxu0 0.0
        %702 = vmatprep.subr.mxu0 0.0
        %703 = vmatpush1.msra.mxu0 0.0
        %704 = vmatprep.subr.mxu0 0.0
        %705 = vmatpush1.msra.mxu0 0.0
        %706 = vmatprep.subr.mxu0 0.0
        %707 = vmatpush1.msra.mxu0 0.0
        %708 = vmatprep.subr.mxu0 0.0
        %709 = vmatpush1.msra.mxu0 %v317
        %710 = vmatprep.subr.mxu0 0.0
        %711 = vmatpush2.msra.mxu0 0.0
        %712 = vmatprep.subr.mxu0 0.0
        %713 = vmatpush2.msra.mxu0 0.0
        %714 = vmatprep.subr.mxu0 0.0
        %715 = vmatpush2.msra.mxu0 0.0
        %716 = vmatprep.subr.mxu0 0.0
        %717 = vmatpush2.msra.mxu0 0.0
        %718 = vmatprep.subr.mxu0 0.0
        %719 = vmatpush2.msra.mxu0 0.0
        %720 = vmatprep.subr.mxu0 0.0
        %721 = vmatpush2.msra.mxu0 0.0
        %722 = vmatprep.subr.mxu0 0.0
        %723 = vmatpush2.msra.mxu0 0.0
        %724 = vmatprep.subr.mxu0 0.0
        %725 = vmatpush2.msra.mxu0 0.0
        %726 = vmatprep.subr.mxu0 0.0
        %727 = vmatpush2.msra.mxu0 0.0
        %728 = vmatprep.subr.mxu0 0.0
        %729 = vmatpush2.msra.mxu0 0.0
        %730 = vmatprep.subr.mxu0 0.0
        %731 = vmatpush2.msra.mxu0 0.0
        %732 = vmatprep.subr.mxu0 0.0
        %733 = vmatpush2.msra.mxu0 0.0
        %734 = vmatprep.subr.mxu0 0.0
        %735 = vmatpush2.msra.mxu0 0.0
        %736 = vmatprep.subr.mxu0 0.0
        %737 = vmatpush2.msra.mxu0 0.0
        %738 = vmatprep.subr.mxu0 0.0
        %739 = vmatpush2.msra.mxu0 0.0
        %740 = vmatprep.subr.mxu0 0.0
        %741 = vmatpush2.msra.mxu0 0.0
        %742 = vmatprep.mubr.f32.mxu0 0.0
        %743 = vmatmul.mubr.f32.gmra.mxu0 %v676
        %v744 = vpop.f32.mrf.mxu0
        %v745 = vadd.f32 0.0, %v744
        %v746 = vpop.f32.mrf.mxu0
        %747 = vdwg.mxu0
        %v749 = vsel %vm630, %v670, 0
        %751 = vmatprep.subr.mxu0 0.0
        %752 = vmatpush1.msra.mxu0 0.0
        %753 = vmatprep.subr.mxu0 0.0
        %754 = vmatpush1.msra.mxu0 0.0
        %755 = vmatprep.subr.mxu0 0.0
        %756 = vmatpush1.msra.mxu0 0.0
        %757 = vmatprep.subr.mxu0 0.0
        %758 = vmatpush1.msra.mxu0 0.0
        %759 = vmatprep.subr.mxu0 0.0
        %760 = vmatpush1.msra.mxu0 0.0
        %761 = vmatprep.subr.mxu0 0.0
        %762 = vmatpush1.msra.mxu0 0.0
        %763 = vmatprep.subr.mxu0 0.0
        %764 = vmatpush1.msra.mxu0 0.0
        %765 = vmatprep.subr.mxu0 0.0
        %766 = vmatpush1.msra.mxu0 0.0
        %767 = vmatprep.subr.mxu0 0.0
        %768 = vmatpush1.msra.mxu0 0.0
        %769 = vmatprep.subr.mxu0 0.0
        %770 = vmatpush1.msra.mxu0 0.0
        %771 = vmatprep.subr.mxu0 0.0
        %772 = vmatpush1.msra.mxu0 0.0
        %773 = vmatprep.subr.mxu0 0.0
        %774 = vmatpush1.msra.mxu0 0.0
        %775 = vmatprep.subr.mxu0 0.0
        %776 = vmatpush1.msra.mxu0 0.0
        %777 = vmatprep.subr.mxu0 0.0
        %778 = vmatpush1.msra.mxu0 0.0
        %779 = vmatprep.subr.mxu0 0.0
        %780 = vmatpush1.msra.mxu0 0.0
        %781 = vmatprep.subr.mxu0 0.0
        %782 = vmatpush1.msra.mxu0 %v318
        %783 = vmatprep.subr.mxu0 0.0
        %784 = vmatpush2.msra.mxu0 0.0
        %785 = vmatprep.subr.mxu0 0.0
        %786 = vmatpush2.msra.mxu0 0.0
        %787 = vmatprep.subr.mxu0 0.0
        %788 = vmatpush2.msra.mxu0 0.0
        %789 = vmatprep.subr.mxu0 0.0
        %790 = vmatpush2.msra.mxu0 0.0
        %791 = vmatprep.subr.mxu0 0.0
        %792 = vmatpush2.msra.mxu0 0.0
        %793 = vmatprep.subr.mxu0 0.0
        %794 = vmatpush2.msra.mxu0 0.0
        %795 = vmatprep.subr.mxu0 0.0
        %796 = vmatpush2.msra.mxu0 0.0
        %797 = vmatprep.subr.mxu0 0.0
        %798 = vmatpush2.msra.mxu0 0.0
        %799 = vmatprep.subr.mxu0 0.0
        %800 = vmatpush2.msra.mxu0 0.0
        %801 = vmatprep.subr.mxu0 0.0
        %802 = vmatpush2.msra.mxu0 0.0
        %803 = vmatprep.subr.mxu0 0.0
        %804 = vmatpush2.msra.mxu0 0.0
        %805 = vmatprep.subr.mxu0 0.0
        %806 = vmatpush2.msra.mxu0 0.0
        %807 = vmatprep.subr.mxu0 0.0
        %808 = vmatpush2.msra.mxu0 0.0
        %809 = vmatprep.subr.mxu0 0.0
        %810 = vmatpush2.msra.mxu0 0.0
        %811 = vmatprep.subr.mxu0 0.0
        %812 = vmatpush2.msra.mxu0 0.0
        %813 = vmatprep.subr.mxu0 0.0
        %814 = vmatpush2.msra.mxu0 0.0
        %815 = vmatprep.mubr.f32.mxu0 0.0
        %816 = vmatmul.mubr.f32.gmra.mxu0 %v749
        %v817 = vpop.f32.mrf.mxu0
        %v818 = vadd.f32 0.0, %v817
        %v819 = vpop.f32.mrf.mxu0
        %820 = vdwg.mxu0
        %v822 = vsel %vm630, %v672, 0
        %824 = vmatprep.subr.mxu0 0.0
        %825 = vmatpush1.msra.mxu0 0.0
        %826 = vmatprep.subr.mxu0 0.0
        %827 = vmatpush1.msra.mxu0 0.0
        %828 = vmatprep.subr.mxu0 0.0
        %829 = vmatpush1.msra.mxu0 0.0
        %830 = vmatprep.subr.mxu0 0.0
        %831 = vmatpush1.msra.mxu0 0.0
        %832 = vmatprep.subr.mxu0 0.0
        %833 = vmatpush1.msra.mxu0 0.0
        %834 = vmatprep.subr.mxu0 0.0
        %835 = vmatpush1.msra.mxu0 0.0
        %836 = vmatprep.subr.mxu0 0.0
        %837 = vmatpush1.msra.mxu0 0.0
        %838 = vmatprep.subr.mxu0 0.0
        %839 = vmatpush1.msra.mxu0 0.0
        %840 = vmatprep.subr.mxu0 0.0
        %841 = vmatpush1.msra.mxu0 0.0
        %842 = vmatprep.subr.mxu0 0.0
        %843 = vmatpush1.msra.mxu0 0.0
        %844 = vmatprep.subr.mxu0 0.0
        %845 = vmatpush1.msra.mxu0 0.0
        %846 = vmatprep.subr.mxu0 0.0
        %847 = vmatpush1.msra.mxu0 0.0
        %848 = vmatprep.subr.mxu0 0.0
        %849 = vmatpush1.msra.mxu0 0.0
        %850 = vmatprep.subr.mxu0 0.0
        %851 = vmatpush1.msra.mxu0 0.0
        %852 = vmatprep.subr.mxu0 0.0
        %853 = vmatpush1.msra.mxu0 0.0
        %854 = vmatprep.subr.mxu0 0.0
        %855 = vmatpush1.msra.mxu0 %v319
        %856 = vmatprep.subr.mxu0 0.0
        %857 = vmatpush2.msra.mxu0 0.0
        %858 = vmatprep.subr.mxu0 0.0
        %859 = vmatpush2.msra.mxu0 0.0
        %860 = vmatprep.subr.mxu0 0.0
        %861 = vmatpush2.msra.mxu0 0.0
        %862 = vmatprep.subr.mxu0 0.0
        %863 = vmatpush2.msra.mxu0 0.0
        %864 = vmatprep.subr.mxu0 0.0
        %865 = vmatpush2.msra.mxu0 0.0
        %866 = vmatprep.subr.mxu0 0.0
        %867 = vmatpush2.msra.mxu0 0.0
        %868 = vmatprep.subr.mxu0 0.0
        %869 = vmatpush2.msra.mxu0 0.0
        %870 = vmatprep.subr.mxu0 0.0
        %871 = vmatpush2.msra.mxu0 0.0
        %872 = vmatprep.subr.mxu0 0.0
        %873 = vmatpush2.msra.mxu0 0.0
        %874 = vmatprep.subr.mxu0 0.0
        %875 = vmatpush2.msra.mxu0 0.0
        %876 = vmatprep.subr.mxu0 0.0
        %877 = vmatpush2.msra.mxu0 0.0
        %878 = vmatprep.subr.mxu0 0.0
        %879 = vmatpush2.msra.mxu0 0.0
        %880 = vmatprep.subr.mxu0 0.0
        %881 = vmatpush2.msra.mxu0 0.0
        %882 = vmatprep.subr.mxu0 0.0
        %883 = vmatpush2.msra.mxu0 0.0
        %884 = vmatprep.subr.mxu0 0.0
        %885 = vmatpush2.msra.mxu0 0.0
        %886 = vmatprep.subr.mxu0 0.0
        %887 = vmatpush2.msra.mxu0 0.0
        %888 = vmatprep.mubr.f32.mxu0 0.0
        %889 = vmatmul.mubr.f32.gmra.mxu0 %v822
        %v890 = vpop.f32.mrf.mxu0
        %v891 = vadd.f32 0.0, %v890
        %v892 = vpop.f32.mrf.mxu0
        %893 = vdwg.mxu0
        %v895 = vsel %vm630, %v674, 0
        %897 = vmatprep.subr.mxu0 0.0
        %898 = vmatpush1.msra.mxu0 0.0
        %899 = vmatprep.subr.mxu0 0.0
        %900 = vmatpush1.msra.mxu0 0.0
        %901 = vmatprep.subr.mxu0 0.0
        %902 = vmatpush1.msra.mxu0 0.0
        %903 = vmatprep.subr.mxu0 0.0
        %904 = vmatpush1.msra.mxu0 0.0
        %905 = vmatprep.subr.mxu0 0.0
        %906 = vmatpush1.msra.mxu0 0.0
        %907 = vmatprep.subr.mxu0 0.0
        %908 = vmatpush1.msra.mxu0 0.0
        %909 = vmatprep.subr.mxu0 0.0
        %910 = vmatpush1.msra.mxu0 0.0
        %911 = vmatprep.subr.mxu0 0.0
        %912 = vmatpush1.msra.mxu0 0.0
        %913 = vmatprep.subr.mxu0 0.0
        %914 = vmatpush1.msra.mxu0 0.0
        %915 = vmatprep.subr.mxu0 0.0
        %916 = vmatpush1.msra.mxu0 0.0
        %917 = vmatprep.subr.mxu0 0.0
        %918 = vmatpush1.msra.mxu0 0.0
        %919 = vmatprep.subr.mxu0 0.0
        %920 = vmatpush1.msra.mxu0 0.0
        %921 = vmatprep.subr.mxu0 0.0
        %922 = vmatpush1.msra.mxu0 0.0
        %923 = vmatprep.subr.mxu0 0.0
        %924 = vmatpush1.msra.mxu0 0.0
        %925 = vmatprep.subr.mxu0 0.0
        %926 = vmatpush1.msra.mxu0 0.0
        %927 = vmatprep.subr.mxu0 0.0
        %928 = vmatpush1.msra.mxu0 %v320
        %929 = vmatprep.subr.mxu0 0.0
        %930 = vmatpush2.msra.mxu0 0.0
        %931 = vmatprep.subr.mxu0 0.0
        %932 = vmatpush2.msra.mxu0 0.0
        %933 = vmatprep.subr.mxu0 0.0
        %934 = vmatpush2.msra.mxu0 0.0
        %935 = vmatprep.subr.mxu0 0.0
        %936 = vmatpush2.msra.mxu0 0.0
        %937 = vmatprep.subr.mxu0 0.0
        %938 = vmatpush2.msra.mxu0 0.0
        %939 = vmatprep.subr.mxu0 0.0
        %940 = vmatpush2.msra.mxu0 0.0
        %941 = vmatprep.subr.mxu0 0.0
        %942 = vmatpush2.msra.mxu0 0.0
        %943 = vmatprep.subr.mxu0 0.0
        %944 = vmatpush2.msra.mxu0 0.0
        %945 = vmatprep.subr.mxu0 0.0
        %946 = vmatpush2.msra.mxu0 0.0
        %947 = vmatprep.subr.mxu0 0.0
        %948 = vmatpush2.msra.mxu0 0.0
        %949 = vmatprep.subr.mxu0 0.0
        %950 = vmatpush2.msra.mxu0 0.0
        %951 = vmatprep.subr.mxu0 0.0
        %952 = vmatpush2.msra.mxu0 0.0
        %953 = vmatprep.subr.mxu0 0.0
        %954 = vmatpush2.msra.mxu0 0.0
        %955 = vmatprep.subr.mxu0 0.0
        %956 = vmatpush2.msra.mxu0 0.0
        %957 = vmatprep.subr.mxu0 0.0
        %958 = vmatpush2.msra.mxu0 0.0
        %959 = vmatprep.subr.mxu0 0.0
        %960 = vmatpush2.msra.mxu0 0.0
        %961 = vmatprep.mubr.f32.mxu0 0.0
        %962 = vmatmul.mubr.f32.gmra.mxu0 %v895
        %v963 = vpop.f32.mrf.mxu0
        %v964 = vadd.f32 0.0, %v963
        %v965 = vpop.f32.mrf.mxu0
        %966 = vdwg.mxu0
        %967 = vst.msk [vmem:[%s296] sm:$0xff] %vm321, %v745
        %968 = vst.msk [vmem:[%s296 + $0x8] sm:$0xff] %vm321, %v818
        %969 = vst.msk [vmem:[%s296 + $0x10] sm:$0xff] %vm321, %v891
        %970 = vst.msk [vmem:[%s296 + $0x18] sm:$0xff] %vm321, %v964
        %971 = vst.msk [vmem:[%s303] sm:$0xff] %vm630, %v668
        %972 = vst.msk [vmem:[%s303 + $0x8] sm:$0xff] %vm630, %v670
        %973 = vst.msk [vmem:[%s303 + $0x10] sm:$0xff] %vm630, %v672
        %974 = vst.msk [vmem:[%s303 + $0x18] sm:$0xff] %vm630, %v674
        %s975 = sand.u32 %s114, 1
        %s976 = scalar_lea.sflag [#allocation4], %s975
        %s977 = sand.u32 %s114, 1
        %s978 = smul.addr %s977, 32
        %s979 = scalar_lea.vmem [#allocation8], %s978
        %s980 = sand.u32 %s140, 1
        %s981 = scalar_lea.sflag [#allocation10], %s980
        %s982 = sand.u32 %s140, 1
        %s983 = smul.addr %s982, 32
        %s984 = scalar_lea.vmem [#allocation9], %s983
        // Predicated region
        $region45: #{tpu_custom_call.1} parent=31 // pred_check
          %p985 = pneg %p124
        $region46: #{tpu_custom_call.1} parent=31 // pred_check_branch
          %987 = sbr.rel (%p985) target = $region48
        $region47: #{tpu_custom_call.1} parent=31 // pred_region
          %s988 = smul.u32 4, %s28
          %s990 = ssub.s32 512, 512
          %991 = vsyncadd %s976, %s990
          %s992 = smul.addr %s988, 128
          %s993 = scalar_lea.hbm %s3, %s992
          %s994 = sshll.u32 %s979, 4
          %s995 = int_to_ptr.vmem [resolvable:$true] %s994
          %1000 = dma.vmem_to_hbm [thread:$0]  %s995, 512, %s993, %s976, 128, 128, 8
        $region48: #{tpu_custom_call.1} parent=31 // pred_fallthru
          _
        // Predicated region
        $region49: #{tpu_custom_call.1} parent=31 // pred_check
          %p1001 = pneg %p150
        $region50: #{tpu_custom_call.1} parent=31 // pred_check_branch
          %1003 = sbr.rel (%p1001) target = $region52
        $region51: #{tpu_custom_call.1} parent=31 // pred_region
          %s1004 = smul.u32 4, %s28
          %s1006 = ssub.s32 512, 512
          %1007 = vsyncadd %s981, %s1006
          %s1008 = smul.addr %s1004, 128
          %s1009 = scalar_lea.hbm %s4, %s1008
          %s1010 = sshll.u32 %s984, 4
          %s1011 = int_to_ptr.vmem [resolvable:$true] %s1010
          %1016 = dma.vmem_to_hbm [thread:$0]  %s1011, 512, %s1009, %s981, 128, 128, 8
        $region52: #{tpu_custom_call.1} parent=31 // pred_fallthru
          _
      $region32: #{tpu_custom_call.1} parent=5 // pred_fallthru
        _
      %p1017 = scmp.le.s32.totalorder 2, %s23
      // Predicated region
      $region53: #{tpu_custom_call.1} parent=5 // pred_check
        %p1018 = pneg %p1017
      $region54: #{tpu_custom_call.1} parent=5 // pred_check_branch
        %1020 = sbr.rel (%p1018) target = $region56
      $region55: #{tpu_custom_call.1} parent=5 // pred_region
        %s1021 = ssub.s32 %s23, 2
        // Predicated region
        $region57: #{tpu_custom_call.1} parent=55 // pred_check
          %p1022 = pneg %p130
        $region58: #{tpu_custom_call.1} parent=55 // pred_check_branch
          %1024 = sbr.rel (%p1022) target = $region60
        $region59: #{tpu_custom_call.1} parent=55 // pred_region
          %s1025 = sand.u32 %s115, 1
          %s1026 = scalar_lea.sflag [#allocation4], %s1025
          %s1027 = sand.u32 %s115, 1
          %s1028 = smul.addr %s1027, 32
          %s1029 = scalar_lea.vmem [#allocation8], %s1028
          %1030 = dma.done %s1026, 512
        $region60: #{tpu_custom_call.1} parent=55 // pred_fallthru
          _
        // Predicated region
        $region61: #{tpu_custom_call.1} parent=55 // pred_check
          %p1031 = pneg %p156
        $region62: #{tpu_custom_call.1} parent=55 // pred_check_branch
          %1033 = sbr.rel (%p1031) target = $region64
        $region63: #{tpu_custom_call.1} parent=55 // pred_region
          %s1034 = sand.u32 %s141, 1
          %s1035 = scalar_lea.sflag [#allocation10], %s1034
          %s1036 = sand.u32 %s141, 1
          %s1037 = smul.addr %s1036, 32
          %s1038 = scalar_lea.vmem [#allocation9], %s1037
          %1039 = dma.done %s1035, 512
        $region64: #{tpu_custom_call.1} parent=55 // pred_fallthru
          _
      $region56: #{tpu_custom_call.1} parent=5 // pred_fallthru
        _
    $region6: #{tpu_custom_call.1} parent=1 // loop_footer
      %s27 = sadd.s32 1, %s23
    $region7: #{tpu_custom_call.1} parent=1 // loop_footer_branch
      %22 = sbr.rel target = $region3
    $region8: #{tpu_custom_call.1} parent=1 // loop_exit
      _
    %1040 = vsyncpa [#allocation3], 1
    %s1041 = scalar_lea.sflag [#allocation3], 1
    %1042 = vsyncpa %s1041, 1
    %1043 = vsyncpa [#allocation6], 1
    %s1044 = scalar_lea.sflag [#allocation6], 1
    %1045 = vsyncpa %s1044, 1
    %1046 = vsyncpa [#allocation4], 1
    %s1047 = scalar_lea.sflag [#allocation4], 1
    %1048 = vsyncpa %s1047, 1
    %1049 = vsyncpa [#allocation10], 1
    %s1050 = scalar_lea.sflag [#allocation10], 1
    %1051 = vsyncpa %s1050, 1

</llo_original>
